<compile_context>
chip_gen: v5e
topology: v5e:2x2
jax: 0.10.0
libtpu: 0.0.40
codegen_flags: <defaults>
</compile_context>

<pallas_src>
import functools

import jax
import jax.numpy as jnp
from jax import lax
from jax.experimental import pallas as pl
from jax.experimental.pallas import tpu as pltpu


def _round_up(n: int, m: int) -> int:
    return -(-n // m) * m


def _interp_matrix(out_size: int, in_size: int) -> jnp.ndarray:
    """PyTorch-style bilinear (align_corners=False) interpolation matrix."""
    scale = in_size / out_size
    src = (jnp.arange(out_size, dtype=jnp.float32) + 0.5) * scale - 0.5
    src = jnp.maximum(src, 0.0)                 # PyTorch clamps negative coords to 0
    i0 = jnp.floor(src).astype(jnp.int32)
    i0 = jnp.minimum(i0, in_size - 1)
    i1 = jnp.minimum(i0 + 1, in_size - 1)
    w1 = src - i0.astype(jnp.float32)
    w0 = 1.0 - w1
    m = (jax.nn.one_hot(i0, in_size, dtype=jnp.float32) * w0[:, None]
         + jax.nn.one_hot(i1, in_size, dtype=jnp.float32) * w1[:, None])
    return m  # (out_size, in_size)


# -----------------------------------------------------------------------------
# Kernels
# -----------------------------------------------------------------------------

def _resize_kernel_w_first(x_ref, a_ref, b_ref, o_ref, v_ref, *,
                           h_in, h_out, tbc, unroll):
    # Upsampling-in-W path (W_out_p >= W_in): lane-dense intermediate = W_out_p.
    # x_ref: (tbc*H_in, W_in)        uint8   -- planes stacked along rows
    # a_ref: (H_out_p, H_in)         float32 -- row interp matrix (incl. 1/255)
    # b_ref: (W_in, W_out_p)         float32 -- column interp matrix
    # o_ref: (tbc*H_out_p, W_out_p)  float32 -- output block
    # v_ref: (tbc*H_in, W_out_p)     float32 -- lane-dense W-pass scratch
    # W-pass: ONE fused matmul over the whole block.
    v_ref[...] = jnp.dot(x_ref[...].astype(jnp.float32), b_ref[...],
                         preferred_element_type=jnp.float32)
    a = a_ref[...]

    def h_pass(p, carry):
        r_in = pl.multiple_of(p * h_in, h_in)
        r_out = pl.multiple_of(p * h_out, h_out)
        o_ref[pl.ds(r_out, h_out), :] = jnp.dot(
            a, v_ref[pl.ds(r_in, h_in), :], preferred_element_type=jnp.float32)
        return carry

    lax.fori_loop(0, tbc, h_pass, 0, unroll=unroll)


def _resize_kernel_h_first(x_ref, a_ref, b_ref, o_ref, u_ref, *,
                           h_out, tbc, unroll):
    # Downsampling-in-W path (W_in > W_out_p): lane-dense intermediate = W_in.
    # x_ref: (tbc, H_in, W_in)       uint8
    # u_ref: (tbc*H_out_p, W_in)     float32 -- H-pass scratch
    a = a_ref[...]

    def h_pass(p, carry):
        r_out = pl.multiple_of(p * h_out, h_out)
        u_ref[pl.ds(r_out, h_out), :] = jnp.dot(
            a, x_ref[p].astype(jnp.float32), preferred_element_type=jnp.float32)
        return carry

    lax.fori_loop(0, tbc, h_pass, 0, unroll=unroll)
    # Fused W-pass: one matmul producing the whole output block (single dense store).
    o_ref[...] = jnp.dot(u_ref[...], b_ref[...],
                         preferred_element_type=jnp.float32)


# -----------------------------------------------------------------------------
# Tiling / VMEM budgeting
# -----------------------------------------------------------------------------

def _vmem_capacity_bytes() -> int:
    try:
        info = pltpu.get_tpu_info()
        return int(getattr(info, "vmem_capacity_bytes", 64 << 20))
    except Exception:
        return 64 << 20   # conservative (v7x-sized) fallback


def _choose_tiling(bc, h_in, w_in, h_out_p, w_out_p, w_first):
    vmem_cap = _vmem_capacity_bytes()
    if vmem_cap >= (100 << 20):          # v5e / v6e: 128 MiB physical VMEM, 1 TC
        budget, vmem_limit, min_steps = 40 << 20, 48 << 20, 2
    else:                                # v7x: 64 MiB physical VMEM, 2 TCs
        budget, vmem_limit, min_steps = 20 << 20, 32 << 20, 4

    bc8 = max(8, _round_up(bc, 8))
    w_in_l = _round_up(w_in, 128)        # lane padding of u8 / scratch last dim

    def working_set(tbc):
        if w_first:
            in_b = 2 * _round_up(tbc * h_in, 32) * w_in_l          # u8 block, dbl-buf
            scr = _round_up(tbc * h_in, 8) * w_out_p * 4           # f32 scratch
        else:
            in_b = 2 * tbc * _round_up(h_in, 32) * w_in_l          # u8 3D block, dbl-buf
            scr = _round_up(tbc * h_out_p, 8) * w_in_l * 4
        out_b = 2 * tbc * h_out_p * w_out_p * 4                    # f32 output, dbl-buf
        consts = 2 * (h_out_p * _round_up(h_in, 128)
                      + _round_up(w_in, 8) * w_out_p) * 4          # A, B (resident)
        return in_b + out_b + scr + consts

    tbc = min(128, bc8)
    while tbc > 8 and working_set(tbc) > budget:
        tbc -= 8
    # Keep >= min_steps grid steps when there is enough work (pipeline overlap,
    # both TensorCores busy on 2-TC chips).
    if bc8 >= 8 * min_steps:
        while tbc > 8 and -(-bc8 // tbc) < min_steps:
            tbc -= 8
    tbc = max(8, tbc)

    n_blocks = -(-bc // tbc)
    if min_steps >= 4 and n_blocks > 1 and n_blocks % 2 == 1:
        n_blocks += 1                    # even split across the 2 TensorCores
    return tbc, n_blocks, vmem_limit


# -----------------------------------------------------------------------------
# Wrapper
# -----------------------------------------------------------------------------

def my_image_preprocessor(x_u8: jnp.ndarray, target_size=(128, 128)) -> jnp.ndarray:
    """x_u8: (B, H, W, C) uint8 NHWC  ->  (B, C, H_out, W_out) float32 NCHW."""
    B, H_in, W_in, C = x_u8.shape
    H_out, W_out = target_size
    BC = B * C

    # Pad output dims so every store is sublane/lane dense (sliced off below).
    H_out_p = _round_up(H_out, 8)
    W_out_p = _round_up(W_out, 128)

    # Pass order: keep the intermediate lane-dense (last dim = max(W_in, W_out_p)).
    w_first = W_out_p >= W_in

    tbc, n_blocks, vmem_limit = _choose_tiling(BC, H_in, W_in, H_out_p, W_out_p, w_first)
    bc_pad = n_blocks * tbc

    # Tiny interpolation matrices, built once.  1/255 folded into A (exact in f32).
    a = (_interp_matrix(H_out, H_in) * (1.0 / 255.0)).astype(jnp.float32)
    if H_out_p != H_out:
        a = jnp.pad(a, ((0, H_out_p - H_out), (0, 0)))              # zero rows
    b = _interp_matrix(W_out, W_in).T.astype(jnp.float32)           # (W_in, W_out)
    if W_out_p != W_out:
        b = jnp.pad(b, ((0, 0), (0, W_out_p - W_out)))              # zero cols

    # Glue: NHWC -> NCHW as uint8 (4x cheaper than an f32 slab); fuse (B, C).
    # TODO(synk): for very large inputs, fold this gather + pad into the BlockSpec
    # index_map (2D grid over plane-block x channel) to avoid extra HBM passes,
    # and tile H_in when a single plane block no longer fits the VMEM budget.
    x_nchw = jnp.transpose(x_u8, (0, 3, 1, 2)).reshape(BC, H_in, W_in)
    if bc_pad != BC:
        x_nchw = jnp.pad(x_nchw, ((0, bc_pad - BC), (0, 0), (0, 0)))

    unroll = True if tbc <= 32 else 8    # full unroll for short plane loops

    if w_first:
        x_in = x_nchw.reshape(bc_pad * H_in, W_in)   # 2D rows-of-planes, no in-kernel reshape
        kernel = functools.partial(_resize_kernel_w_first, h_in=H_in,
                                   h_out=H_out_p, tbc=tbc, unroll=unroll)
        x_spec = pl.BlockSpec((tbc * H_in, W_in), lambda i: (i, 0))
        scratch = pltpu.VMEM((tbc * H_in, W_out_p), jnp.float32)
        flops = 2 * bc_pad * (H_in * W_in * W_out_p + H_out_p * H_in * W_out_p)
    else:
        x_in = x_nchw
        kernel = functools.partial(_resize_kernel_h_first, h_out=H_out_p,
                                   tbc=tbc, unroll=unroll)
        x_spec = pl.BlockSpec((tbc, H_in, W_in), lambda i: (i, 0, 0))
        scratch = pltpu.VMEM((tbc * H_out_p, W_in), jnp.float32)
        flops = 2 * bc_pad * (H_out_p * H_in * W_in + H_out_p * W_in * W_out_p)

    bytes_accessed = (bc_pad * H_in * W_in                        # uint8 input
                      + bc_pad * H_out_p * W_out_p * 4            # f32 output (dominant)
                      + (H_out_p * H_in + W_in * W_out_p) * 4)    # A, B

    out = pl.pallas_call(
        kernel,
        out_shape=jax.ShapeDtypeStruct((bc_pad * H_out_p, W_out_p), jnp.float32),
        grid=(n_blocks,),
        in_specs=[
            x_spec,
            pl.BlockSpec((H_out_p, H_in), lambda i: (0, 0)),      # A (resident)
            pl.BlockSpec((W_in, W_out_p), lambda i: (0, 0)),      # B (resident)
        ],
        out_specs=pl.BlockSpec((tbc * H_out_p, W_out_p), lambda i: (i, 0)),
        scratch_shapes=[scratch],
        compiler_params=pltpu.CompilerParams(
            dimension_semantics=("parallel",),
            vmem_limit_bytes=vmem_limit,
        ),
        cost_estimate=pl.CostEstimate(flops=int(flops), transcendentals=0,
                                      bytes_accessed=int(bytes_accessed)),
    )(x_in, a, b)

    out = out.reshape(bc_pad, H_out_p, W_out_p)[:BC, :H_out, :W_out]
    return out.reshape(B, C, H_out, W_out)


# -----------------------------------------------------------------------------
# Self-test
# -----------------------------------------------------------------------------

def _reference(x_u8, target_size):
    """Plain-JAX reference matching the PyTorch forward (permute -> /255 -> bilinear)."""
    xf = jnp.transpose(x_u8, (0, 3, 1, 2)).astype(jnp.float32) / 255.0
    a_m = _interp_matrix(target_size[0], x_u8.shape[1])
    b_m = _interp_matrix(target_size[1], x_u8.shape[2]).T
    return jnp.einsum("oh,bchw,wv->bcov", a_m, xf, b_m,
                      precision=lax.Precision.HIGHEST)


if __name__ == "__main__":
    key = jax.random.PRNGKey(0)
    k1, k2 = jax.random.split(key)

    # Test 1: module-default target (128, 128), small NHWC uint8 batch
    # (exercises the lane-dense W-pass-first / upsampling kernel).
    x1 = jax.random.randint(k1, (2, 16, 16, 3), 0, 256, dtype=jnp.int32).astype(jnp.uint8)
    out1 = jax.block_until_ready(my_image_preprocessor(x1, target_size=(128, 128)))
    ref1 = _reference(x1, (128, 128))
    assert out1.shape == (2, 3, 128, 128) and out1.dtype == jnp.float32
    assert jnp.allclose(out1, ref1, atol=1e-5, rtol=1e-5)

    # Test 2: W downsampling (W_in > 128) exercises the H-pass-first kernel.
    x2 = jax.random.randint(k2, (1, 48, 160, 3), 0, 256, dtype=jnp.int32).astype(jnp.uint8)
    out2 = jax.block_until_ready(my_image_preprocessor(x2, target_size=(24, 32)))
    ref2 = _reference(x2, (24, 32))
    assert out2.shape == (1, 3, 24, 32) and out2.dtype == jnp.float32
    assert jnp.allclose(out2, ref2, atol=1e-5, rtol=1e-5)

    print("KERNEL_OK")
</pallas_src>

<mosaic_0001>
module attributes {stable_mosaic.version = 11 : i64} {
  func.func @_resize_kernel_w_first(%arg0: i32, %arg1: memref<128x16xi8, #tpu.memory_space<vmem>>, %arg2: memref<128x16xf32, #tpu.memory_space<vmem>>, %arg3: memref<16x128xf32, #tpu.memory_space<vmem>>, %arg4: memref<1024x128xf32, #tpu.memory_space<vmem>>, %arg5: memref<128x128xf32, #tpu.memory_space<vmem>>) attributes {dimension_semantics = [#tpu.dimension_semantics<parallel>], iteration_bounds = array<i64: 1>, scalar_prefetch = 0 : i64, scratch_operands = 1 : i64, tpu.core_type = #tpu.core_type<tc>, window_params = [{transform_indices = @transform_0, window_bounds = array<i64: 128, 16>}, {pipeline_mode = #tpu.pipeline_mode<synchronous>, transform_indices = @transform_1, window_bounds = array<i64: 128, 16>}, {pipeline_mode = #tpu.pipeline_mode<synchronous>, transform_indices = @transform_2, window_bounds = array<i64: 16, 128>}, {transform_indices = @transform_3, window_bounds = array<i64: 1024, 128>}]} {
    %c0 = arith.constant 0 : index
    %c0_0 = arith.constant 0 : index
    %0 = vector.load %arg1[%c0, %c0_0] : memref<128x16xi8, #tpu.memory_space<vmem>>, vector<128x16xi8>
    %1 = arith.uitofp %0 : vector<128x16xi8> to vector<128x16xf32>
    %c0_1 = arith.constant 0 : index
    %c0_2 = arith.constant 0 : index
    %2 = vector.load %arg3[%c0_1, %c0_2] : memref<16x128xf32, #tpu.memory_space<vmem>>, vector<16x128xf32>
    %cst = arith.constant dense<0.000000e+00> : vector<128x128xf32>
    %3 = tpu.matmul %1, %2, %cst {dimension_numbers = #tpu.dot_dimension_numbers<[1], [0], [0], [1], [0, 0, 1, 1], [], []>} : vector<128x16xf32>, vector<16x128xf32>, vector<128x128xf32> -> vector<128x128xf32>
    %c0_3 = arith.constant 0 : index
    %c0_4 = arith.constant 0 : index
    %4 = vector.load %arg5[%c0_3, %c0_4] : memref<128x128xf32, #tpu.memory_space<vmem>>, vector<128x128xf32>
    tpu.vector_store %arg5[%c0_3, %c0_4], %3 {strides = array<i32>} : memref<128x128xf32, #tpu.memory_space<vmem>>, vector<128x128xf32>,
    %c0_5 = arith.constant 0 : index
    %c0_6 = arith.constant 0 : index
    %5 = vector.load %arg2[%c0_5, %c0_6] : memref<128x16xf32, #tpu.memory_space<vmem>>, vector<128x16xf32>
    %c0_i32 = arith.constant 0 : i32
    %c16_i32 = arith.constant 16 : i32
    %6 = arith.muli %c0_i32, %c16_i32 : i32
    %7 = tpu.assume_multiple %6, 16 : i32
    %c128_i32 = arith.constant 128 : i32
    %8 = arith.muli %c0_i32, %c128_i32 : i32
    %9 = tpu.assume_multiple %8, 128 : i32
    %10 = arith.index_cast %7 : i32 to index
    %c0_7 = arith.constant 0 : index
    %11 = vector.load %arg5[%10, %c0_7] : memref<128x128xf32, #tpu.memory_space<vmem>>, vector<16x128xf32>
    %cst_8 = arith.constant dense<0.000000e+00> : vector<128x128xf32>
    %12 = tpu.matmul %5, %11, %cst_8 {dimension_numbers = #tpu.dot_dimension_numbers<[1], [0], [0], [1], [0, 0, 1, 1], [], []>} : vector<128x16xf32>, vector<16x128xf32>, vector<128x128xf32> -> vector<128x128xf32>
    %13 = arith.index_cast %9 : i32 to index
    %c0_9 = arith.constant 0 : index
    %14 = vector.load %arg4[%13, %c0_9] : memref<1024x128xf32, #tpu.memory_space<vmem>>, vector<128x128xf32>
    tpu.vector_store %arg4[%13, %c0_9], %12 {strides = array<i32>} : memref<1024x128xf32, #tpu.memory_space<vmem>>, vector<128x128xf32>,
    %c1_i32 = arith.constant 1 : i32
    %c16_i32_10 = arith.constant 16 : i32
    %15 = arith.muli %c1_i32, %c16_i32_10 : i32
    %16 = tpu.assume_multiple %15, 16 : i32
    %c128_i32_11 = arith.constant 128 : i32
    %17 = arith.muli %c1_i32, %c128_i32_11 : i32
    %18 = tpu.assume_multiple %17, 128 : i32
    %19 = arith.index_cast %16 : i32 to index
    %c0_12 = arith.constant 0 : index
    %20 = vector.load %arg5[%19, %c0_12] : memref<128x128xf32, #tpu.memory_space<vmem>>, vector<16x128xf32>
    %cst_13 = arith.constant dense<0.000000e+00> : vector<128x128xf32>
    %21 = tpu.matmul %5, %20, %cst_13 {dimension_numbers = #tpu.dot_dimension_numbers<[1], [0], [0], [1], [0, 0, 1, 1], [], []>} : vector<128x16xf32>, vector<16x128xf32>, vector<128x128xf32> -> vector<128x128xf32>
    %22 = arith.index_cast %18 : i32 to index
    %c0_14 = arith.constant 0 : index
    %23 = vector.load %arg4[%22, %c0_14] : memref<1024x128xf32, #tpu.memory_space<vmem>>, vector<128x128xf32>
    tpu.vector_store %arg4[%22, %c0_14], %21 {strides = array<i32>} : memref<1024x128xf32, #tpu.memory_space<vmem>>, vector<128x128xf32>,
    %c2_i32 = arith.constant 2 : i32
    %c16_i32_15 = arith.constant 16 : i32
    %24 = arith.muli %c2_i32, %c16_i32_15 : i32
    %25 = tpu.assume_multiple %24, 16 : i32
    %c128_i32_16 = arith.constant 128 : i32
    %26 = arith.muli %c2_i32, %c128_i32_16 : i32
    %27 = tpu.assume_multiple %26, 128 : i32
    %28 = arith.index_cast %25 : i32 to index
    %c0_17 = arith.constant 0 : index
    %29 = vector.load %arg5[%28, %c0_17] : memref<128x128xf32, #tpu.memory_space<vmem>>, vector<16x128xf32>
    %cst_18 = arith.constant dense<0.000000e+00> : vector<128x128xf32>
    %30 = tpu.matmul %5, %29, %cst_18 {dimension_numbers = #tpu.dot_dimension_numbers<[1], [0], [0], [1], [0, 0, 1, 1], [], []>} : vector<128x16xf32>, vector<16x128xf32>, vector<128x128xf32> -> vector<128x128xf32>
    %31 = arith.index_cast %27 : i32 to index
    %c0_19 = arith.constant 0 : index
    %32 = vector.load %arg4[%31, %c0_19] : memref<1024x128xf32, #tpu.memory_space<vmem>>, vector<128x128xf32>
    tpu.vector_store %arg4[%31, %c0_19], %30 {strides = array<i32>} : memref<1024x128xf32, #tpu.memory_space<vmem>>, vector<128x128xf32>,
    %c3_i32 = arith.constant 3 : i32
    %c16_i32_20 = arith.constant 16 : i32
    %33 = arith.muli %c3_i32, %c16_i32_20 : i32
    %34 = tpu.assume_multiple %33, 16 : i32
    %c128_i32_21 = arith.constant 128 : i32
    %35 = arith.muli %c3_i32, %c128_i32_21 : i32
    %36 = tpu.assume_multiple %35, 128 : i32
    %37 = arith.index_cast %34 : i32 to index
    %c0_22 = arith.constant 0 : index
    %38 = vector.load %arg5[%37, %c0_22] : memref<128x128xf32, #tpu.memory_space<vmem>>, vector<16x128xf32>
    %cst_23 = arith.constant dense<0.000000e+00> : vector<128x128xf32>
    %39 = tpu.matmul %5, %38, %cst_23 {dimension_numbers = #tpu.dot_dimension_numbers<[1], [0], [0], [1], [0, 0, 1, 1], [], []>} : vector<128x16xf32>, vector<16x128xf32>, vector<128x128xf32> -> vector<128x128xf32>
    %40 = arith.index_cast %36 : i32 to index
    %c0_24 = arith.constant 0 : index
    %41 = vector.load %arg4[%40, %c0_24] : memref<1024x128xf32, #tpu.memory_space<vmem>>, vector<128x128xf32>
    tpu.vector_store %arg4[%40, %c0_24], %39 {strides = array<i32>} : memref<1024x128xf32, #tpu.memory_space<vmem>>, vector<128x128xf32>,
    %c4_i32 = arith.constant 4 : i32
    %c16_i32_25 = arith.constant 16 : i32
    %42 = arith.muli %c4_i32, %c16_i32_25 : i32
    %43 = tpu.assume_multiple %42, 16 : i32
    %c128_i32_26 = arith.constant 128 : i32
    %44 = arith.muli %c4_i32, %c128_i32_26 : i32
    %45 = tpu.assume_multiple %44, 128 : i32
    %46 = arith.index_cast %43 : i32 to index
    %c0_27 = arith.constant 0 : index
    %47 = vector.load %arg5[%46, %c0_27] : memref<128x128xf32, #tpu.memory_space<vmem>>, vector<16x128xf32>
    %cst_28 = arith.constant dense<0.000000e+00> : vector<128x128xf32>
    %48 = tpu.matmul %5, %47, %cst_28 {dimension_numbers = #tpu.dot_dimension_numbers<[1], [0], [0], [1], [0, 0, 1, 1], [], []>} : vector<128x16xf32>, vector<16x128xf32>, vector<128x128xf32> -> vector<128x128xf32>
    %49 = arith.index_cast %45 : i32 to index
    %c0_29 = arith.constant 0 : index
    %50 = vector.load %arg4[%49, %c0_29] : memref<1024x128xf32, #tpu.memory_space<vmem>>, vector<128x128xf32>
    tpu.vector_store %arg4[%49, %c0_29], %48 {strides = array<i32>} : memref<1024x128xf32, #tpu.memory_space<vmem>>, vector<128x128xf32>,
    %c5_i32 = arith.constant 5 : i32
    %c16_i32_30 = arith.constant 16 : i32
    %51 = arith.muli %c5_i32, %c16_i32_30 : i32
    %52 = tpu.assume_multiple %51, 16 : i32
    %c128_i32_31 = arith.constant 128 : i32
    %53 = arith.muli %c5_i32, %c128_i32_31 : i32
    %54 = tpu.assume_multiple %53, 128 : i32
    %55 = arith.index_cast %52 : i32 to index
    %c0_32 = arith.constant 0 : index
    %56 = vector.load %arg5[%55, %c0_32] : memref<128x128xf32, #tpu.memory_space<vmem>>, vector<16x128xf32>
    %cst_33 = arith.constant dense<0.000000e+00> : vector<128x128xf32>
    %57 = tpu.matmul %5, %56, %cst_33 {dimension_numbers = #tpu.dot_dimension_numbers<[1], [0], [0], [1], [0, 0, 1, 1], [], []>} : vector<128x16xf32>, vector<16x128xf32>, vector<128x128xf32> -> vector<128x128xf32>
    %58 = arith.index_cast %54 : i32 to index
    %c0_34 = arith.constant 0 : index
    %59 = vector.load %arg4[%58, %c0_34] : memref<1024x128xf32, #tpu.memory_space<vmem>>, vector<128x128xf32>
    tpu.vector_store %arg4[%58, %c0_34], %57 {strides = array<i32>} : memref<1024x128xf32, #tpu.memory_space<vmem>>, vector<128x128xf32>,
    %c6_i32 = arith.constant 6 : i32
    %c16_i32_35 = arith.constant 16 : i32
    %60 = arith.muli %c6_i32, %c16_i32_35 : i32
    %61 = tpu.assume_multiple %60, 16 : i32
    %c128_i32_36 = arith.constant 128 : i32
    %62 = arith.muli %c6_i32, %c128_i32_36 : i32
    %63 = tpu.assume_multiple %62, 128 : i32
    %64 = arith.index_cast %61 : i32 to index
    %c0_37 = arith.constant 0 : index
    %65 = vector.load %arg5[%64, %c0_37] : memref<128x128xf32, #tpu.memory_space<vmem>>, vector<16x128xf32>
    %cst_38 = arith.constant dense<0.000000e+00> : vector<128x128xf32>
    %66 = tpu.matmul %5, %65, %cst_38 {dimension_numbers = #tpu.dot_dimension_numbers<[1], [0], [0], [1], [0, 0, 1, 1], [], []>} : vector<128x16xf32>, vector<16x128xf32>, vector<128x128xf32> -> vector<128x128xf32>
    %67 = arith.index_cast %63 : i32 to index
    %c0_39 = arith.constant 0 : index
    %68 = vector.load %arg4[%67, %c0_39] : memref<1024x128xf32, #tpu.memory_space<vmem>>, vector<128x128xf32>
    tpu.vector_store %arg4[%67, %c0_39], %66 {strides = array<i32>} : memref<1024x128xf32, #tpu.memory_space<vmem>>, vector<128x128xf32>,
    %c7_i32 = arith.constant 7 : i32
    %c16_i32_40 = arith.constant 16 : i32
    %69 = arith.muli %c7_i32, %c16_i32_40 : i32
    %70 = tpu.assume_multiple %69, 16 : i32
    %c128_i32_41 = arith.constant 128 : i32
    %71 = arith.muli %c7_i32, %c128_i32_41 : i32
    %72 = tpu.assume_multiple %71, 128 : i32
    %73 = arith.index_cast %70 : i32 to index
    %c0_42 = arith.constant 0 : index
    %74 = vector.load %arg5[%73, %c0_42] : memref<128x128xf32, #tpu.memory_space<vmem>>, vector<16x128xf32>
    %cst_43 = arith.constant dense<0.000000e+00> : vector<128x128xf32>
    %75 = tpu.matmul %5, %74, %cst_43 {dimension_numbers = #tpu.dot_dimension_numbers<[1], [0], [0], [1], [0, 0, 1, 1], [], []>} : vector<128x16xf32>, vector<16x128xf32>, vector<128x128xf32> -> vector<128x128xf32>
    %76 = arith.index_cast %72 : i32 to index
    %c0_44 = arith.constant 0 : index
    %77 = vector.load %arg4[%76, %c0_44] : memref<1024x128xf32, #tpu.memory_space<vmem>>, vector<128x128xf32>
    tpu.vector_store %arg4[%76, %c0_44], %75 {strides = array<i32>} : memref<1024x128xf32, #tpu.memory_space<vmem>>, vector<128x128xf32>,
    %c8_i32 = arith.constant 8 : i32
    return
  }
  func.func @transform_0(%arg0: i32) -> (i32, i32) {
    %c0_i32 = arith.constant 0 : i32
    %c0_i32_0 = arith.constant 0 : i32
    return %arg0, %c0_i32 : i32, i32
  }
  func.func @transform_1(%arg0: i32) -> (i32, i32) {
    %c0_i32 = arith.constant 0 : i32
    %c0_i32_0 = arith.constant 0 : i32
    %c0_i32_1 = arith.constant 0 : i32
    return %c0_i32, %c0_i32_0 : i32, i32
  }
  func.func @transform_2(%arg0: i32) -> (i32, i32) {
    %c0_i32 = arith.constant 0 : i32
    %c0_i32_0 = arith.constant 0 : i32
    %c0_i32_1 = arith.constant 0 : i32
    return %c0_i32, %c0_i32_0 : i32, i32
  }
  func.func @transform_3(%arg0: i32) -> (i32, i32) {
    %c0_i32 = arith.constant 0 : i32
    %c0_i32_0 = arith.constant 0 : i32
    return %arg0, %c0_i32 : i32, i32
  }
}

</mosaic_0001>

<llo_original>
// kernel: tpu_custom_call.1
$region0: #{tpu_custom_call.1}
  #allocation0 [shape = 'u32[]', space=smem, size = 0x4, offset = 0x4, fixed_abs, tag = 'smem constant byte address 0x4 - core index']
  #allocation1 [shape = 'u32[72,128]{1,0:T(1,128)}', space=vmem, size = 0x9000, scoped, tag = 'internal scratch']
  #allocation2 [shape = 'f32[128,128]{1,0:T(8,128)}', space=vmem, size = 0x10000, scoped, tag = 'scratch operand']
  %s0 = inlined_call_operand.vmem [shape: u8[128,16], index: 0, kind: input, shape index: {}]
  %s1 = inlined_call_operand.vmem [shape: f32[128,16], index: 1, kind: input, shape index: {}]
  %s2 = inlined_call_operand.vmem [shape: f32[16,128], index: 2, kind: input, shape index: {}]
  %s3 = inlined_call_operand.hbm [shape: f32[1024,128], index: 3, kind: output, shape index: {}]
  %s4 = sld [smem:[#allocation0]]
  $region22: #{tpu_custom_call.1} parent=0
    _
  %s6 = ssub.s32 1, %s4
  %s7 = scalar_select 0, %s6, %s4
  $region1: #{tpu_custom_call.1} parent=0
    #allocation3 [shape = 'u8[524288]{0}', space=vmem, size = 0x80000, scoped, tag = 'output window, operand 0, single buffered']
    #allocation4 [shape = 's32[1]{0}', space=sflag, size = 0x4, scoped, tag = 'scoped memory for tpu_custom_call.1']
    %8 = vsyncpa [#allocation4], 0
    // Predicated region
    $region2: #{tpu_custom_call.1} parent=1 // pred_check
      _
    $region3: #{tpu_custom_call.1} parent=1 // pred_check_branch
      %10 = sbr.rel (0) target = $region5
    $region4: #{tpu_custom_call.1} parent=1 // pred_region
      _
    $region5: #{tpu_custom_call.1} parent=1 // pred_fallthru
      _
    // Predicated region
    $region6: #{tpu_custom_call.1} parent=1 // pred_check
      _
    $region7: #{tpu_custom_call.1} parent=1 // pred_check_branch
      %12 = sbr.rel (0) target = $region9
    $region8: #{tpu_custom_call.1} parent=1 // pred_region
      _
    $region9: #{tpu_custom_call.1} parent=1 // pred_fallthru
      _
    // Predicated region
    $region10: #{tpu_custom_call.1} parent=1 // pred_check
      _
    $region11: #{tpu_custom_call.1} parent=1 // pred_check_branch
      %14 = sbr.rel (0) target = $region13
    $region12: #{tpu_custom_call.1} parent=1 // pred_region
      _
    $region13: #{tpu_custom_call.1} parent=1 // pred_fallthru
      _
    %v15 = vld [vmem:[%s0] sm:$0xff]
    %v16 = vld [vmem:[%s0 + $0x8] sm:$0xff]
    %v17 = vld [vmem:[%s0 + $0x10] sm:$0xff]
    %v18 = vld [vmem:[%s0 + $0x18] sm:$0xff]
    %v19 = vunpack.c.0.s8 %v15
    %v20 = vunpack.c.1.s8 %v15
    %v21 = vunpack.c.2.s8 %v15
    %v22 = vunpack.c.3.s8 %v15
    %v23 = vunpack.c.0.s8 %v16
    %v24 = vunpack.c.1.s8 %v16
    %v25 = vunpack.c.2.s8 %v16
    %v26 = vunpack.c.3.s8 %v16
    %v27 = vunpack.c.0.s8 %v17
    %v28 = vunpack.c.1.s8 %v17
    %v29 = vunpack.c.2.s8 %v17
    %v30 = vunpack.c.3.s8 %v17
    %v31 = vunpack.c.0.s8 %v18
    %v32 = vunpack.c.1.s8 %v18
    %v33 = vunpack.c.2.s8 %v18
    %v34 = vunpack.c.3.s8 %v18
    %v35 = vand.u32 %v19, 255
    %v36 = vand.u32 %v20, 255
    %v37 = vand.u32 %v21, 255
    %v38 = vand.u32 %v22, 255
    %v39 = vand.u32 %v23, 255
    %v40 = vand.u32 %v24, 255
    %v41 = vand.u32 %v25, 255
    %v42 = vand.u32 %v26, 255
    %v43 = vand.u32 %v27, 255
    %v44 = vand.u32 %v28, 255
    %v45 = vand.u32 %v29, 255
    %v46 = vand.u32 %v30, 255
    %v47 = vand.u32 %v31, 255
    %v48 = vand.u32 %v32, 255
    %v49 = vand.u32 %v33, 255
    %v50 = vand.u32 %v34, 255
    %v51 = vcvt.s32.f32 %v35
    %v52 = vcvt.s32.f32 %v36
    %v53 = vcvt.s32.f32 %v37
    %v54 = vcvt.s32.f32 %v38
    %v55 = vcvt.s32.f32 %v39
    %v56 = vcvt.s32.f32 %v40
    %v57 = vcvt.s32.f32 %v41
    %v58 = vcvt.s32.f32 %v42
    %v59 = vcvt.s32.f32 %v43
    %v60 = vcvt.s32.f32 %v44
    %v61 = vcvt.s32.f32 %v45
    %v62 = vcvt.s32.f32 %v46
    %v63 = vcvt.s32.f32 %v47
    %v64 = vcvt.s32.f32 %v48
    %v65 = vcvt.s32.f32 %v49
    %v66 = vcvt.s32.f32 %v50
    %v67 = vld [vmem:[%s2] sm:$0xff]
    %v68 = vld [vmem:[%s2 + $0x8] sm:$0xff]
    %vm69 = vcmask 130048
    %v71 = vsel %vm69, %v51, 0
    %v74 = vsel %vm69, %v52, 0
    %v77 = vsel %vm69, %v53, 0
    %v80 = vsel %vm69, %v54, 0
    %v83 = vsel %vm69, %v55, 0
    %v86 = vsel %vm69, %v56, 0
    %v89 = vsel %vm69, %v57, 0
    %v92 = vsel %vm69, %v58, 0
    %v95 = vsel %vm69, %v59, 0
    %v98 = vsel %vm69, %v60, 0
    %v101 = vsel %vm69, %v61, 0
    %v104 = vsel %vm69, %v62, 0
    %v107 = vsel %vm69, %v63, 0
    %v110 = vsel %vm69, %v64, 0
    %v113 = vsel %vm69, %v65, 0
    %v116 = vsel %vm69, %v66, 0
    %118 = vmatpush.msra.mxu0 0.0
    %119 = vmatpush.msra.mxu0 0.0
    %120 = vmatpush.msra.mxu0 0.0
    %121 = vmatpush.msra.mxu0 0.0
    %122 = vmatpush.msra.mxu0 0.0
    %123 = vmatpush.msra.mxu0 0.0
    %124 = vmatpush.msra.mxu0 0.0
    %125 = vmatpush.msra.mxu0 0.0
    %126 = vmatpush.msra.mxu0 0.0
    %127 = vmatpush.msra.mxu0 0.0
    %128 = vmatpush.msra.mxu0 0.0
    %129 = vmatpush.msra.mxu0 0.0
    %130 = vmatpush.msra.mxu0 0.0
    %131 = vmatpush.msra.mxu0 0.0
    %132 = vmatpush.msra.mxu0 %v68
    %133 = vmatpush.msra.mxu0 %v67
    %134 = vmatmul.f32.gmra.mxu0 %v71
    %v135 = vpop.f32.mrf.mxu0
    %v136 = vadd.f32 0.0, %v135
    %137 = vmatmul.f32.gmra.mxu0 %v74
    %v138 = vpop.f32.mrf.mxu0
    %v139 = vadd.f32 0.0, %v138
    %140 = vmatmul.f32.gmra.mxu0 %v77
    %v141 = vpop.f32.mrf.mxu0
    %v142 = vadd.f32 0.0, %v141
    %143 = vmatmul.f32.gmra.mxu0 %v80
    %v144 = vpop.f32.mrf.mxu0
    %v145 = vadd.f32 0.0, %v144
    %146 = vmatmul.f32.gmra.mxu0 %v83
    %v147 = vpop.f32.mrf.mxu0
    %v148 = vadd.f32 0.0, %v147
    %149 = vmatmul.f32.gmra.mxu0 %v86
    %v150 = vpop.f32.mrf.mxu0
    %v151 = vadd.f32 0.0, %v150
    %152 = vmatmul.f32.gmra.mxu0 %v89
    %v153 = vpop.f32.mrf.mxu0
    %v154 = vadd.f32 0.0, %v153
    %155 = vmatmul.f32.gmra.mxu0 %v92
    %v156 = vpop.f32.mrf.mxu0
    %v157 = vadd.f32 0.0, %v156
    %158 = vmatmul.f32.gmra.mxu0 %v95
    %v159 = vpop.f32.mrf.mxu0
    %v160 = vadd.f32 0.0, %v159
    %161 = vmatmul.f32.gmra.mxu0 %v98
    %v162 = vpop.f32.mrf.mxu0
    %v163 = vadd.f32 0.0, %v162
    %164 = vmatmul.f32.gmra.mxu0 %v101
    %v165 = vpop.f32.mrf.mxu0
    %v166 = vadd.f32 0.0, %v165
    %167 = vmatmul.f32.gmra.mxu0 %v104
    %v168 = vpop.f32.mrf.mxu0
    %v169 = vadd.f32 0.0, %v168
    %170 = vmatmul.f32.gmra.mxu0 %v107
    %v171 = vpop.f32.mrf.mxu0
    %v172 = vadd.f32 0.0, %v171
    %173 = vmatmul.f32.gmra.mxu0 %v110
    %v174 = vpop.f32.mrf.mxu0
    %v175 = vadd.f32 0.0, %v174
    %176 = vmatmul.f32.gmra.mxu0 %v113
    %v177 = vpop.f32.mrf.mxu0
    %v178 = vadd.f32 0.0, %v177
    %179 = vmatmul.f32.gmra.mxu0 %v116
    %v180 = vpop.f32.mrf.mxu0
    %v181 = vadd.f32 0.0, %v180
    %182 = vdwg.mxu0
    %183 = vst [vmem:[#allocation2] sm:$0xff] %v136
    %184 = vst [vmem:[#allocation2 + $0x8] sm:$0xff] %v139
    %185 = vst [vmem:[#allocation2 + $0x10] sm:$0xff] %v142
    %186 = vst [vmem:[#allocation2 + $0x18] sm:$0xff] %v145
    %187 = vst [vmem:[#allocation2 + $0x20] sm:$0xff] %v148
    %188 = vst [vmem:[#allocation2 + $0x28] sm:$0xff] %v151
    %189 = vst [vmem:[#allocation2 + $0x30] sm:$0xff] %v154
    %190 = vst [vmem:[#allocation2 + $0x38] sm:$0xff] %v157
    %191 = vst [vmem:[#allocation2 + $0x40] sm:$0xff] %v160
    %192 = vst [vmem:[#allocation2 + $0x48] sm:$0xff] %v163
    %193 = vst [vmem:[#allocation2 + $0x50] sm:$0xff] %v166
    %194 = vst [vmem:[#allocation2 + $0x58] sm:$0xff] %v169
    %195 = vst [vmem:[#allocation2 + $0x60] sm:$0xff] %v172
    %196 = vst [vmem:[#allocation2 + $0x68] sm:$0xff] %v175
    %197 = vst [vmem:[#allocation2 + $0x70] sm:$0xff] %v178
    %198 = vst [vmem:[#allocation2 + $0x78] sm:$0xff] %v181
    %v199 = vld [vmem:[%s1] sm:$0xff]
    %v200 = vld [vmem:[%s1 + $0x8] sm:$0xff]
    %v201 = vld [vmem:[%s1 + $0x10] sm:$0xff]
    %v202 = vld [vmem:[%s1 + $0x18] sm:$0xff]
    %v203 = vld [vmem:[%s1 + $0x20] sm:$0xff]
    %v204 = vld [vmem:[%s1 + $0x28] sm:$0xff]
    %v205 = vld [vmem:[%s1 + $0x30] sm:$0xff]
    %v206 = vld [vmem:[%s1 + $0x38] sm:$0xff]
    %v207 = vld [vmem:[%s1 + $0x40] sm:$0xff]
    %v208 = vld [vmem:[%s1 + $0x48] sm:$0xff]
    %v209 = vld [vmem:[%s1 + $0x50] sm:$0xff]
    %v210 = vld [vmem:[%s1 + $0x58] sm:$0xff]
    %v211 = vld [vmem:[%s1 + $0x60] sm:$0xff]
    %v212 = vld [vmem:[%s1 + $0x68] sm:$0xff]
    %v213 = vld [vmem:[%s1 + $0x70] sm:$0xff]
    %v214 = vld [vmem:[%s1 + $0x78] sm:$0xff]
    %v215 = vld [vmem:[#allocation2] sm:$0xff]
    %v216 = vld [vmem:[#allocation2 + $0x8] sm:$0xff]
    %v218 = vsel %vm69, %v199, 0
    %v221 = vsel %vm69, %v200, 0
    %v224 = vsel %vm69, %v201, 0
    %v227 = vsel %vm69, %v202, 0
    %v230 = vsel %vm69, %v203, 0
    %v233 = vsel %vm69, %v204, 0
    %v236 = vsel %vm69, %v205, 0
    %v239 = vsel %vm69, %v206, 0
    %v242 = vsel %vm69, %v207, 0
    %v245 = vsel %vm69, %v208, 0
    %v248 = vsel %vm69, %v209, 0
    %v251 = vsel %vm69, %v210, 0
    %v254 = vsel %vm69, %v211, 0
    %v257 = vsel %vm69, %v212, 0
    %v260 = vsel %vm69, %v213, 0
    %v263 = vsel %vm69, %v214, 0
    %265 = vmatpush.msra.mxu0 0.0
    %266 = vmatpush.msra.mxu0 0.0
    %267 = vmatpush.msra.mxu0 0.0
    %268 = vmatpush.msra.mxu0 0.0
    %269 = vmatpush.msra.mxu0 0.0
    %270 = vmatpush.msra.mxu0 0.0
    %271 = vmatpush.msra.mxu0 0.0
    %272 = vmatpush.msra.mxu0 0.0
    %273 = vmatpush.msra.mxu0 0.0
    %274 = vmatpush.msra.mxu0 0.0
    %275 = vmatpush.msra.mxu0 0.0
    %276 = vmatpush.msra.mxu0 0.0
    %277 = vmatpush.msra.mxu0 0.0
    %278 = vmatpush.msra.mxu0 0.0
    %279 = vmatpush.msra.mxu0 %v216
    %280 = vmatpush.msra.mxu0 %v215
    %281 = vmatmul.f32.gmra.mxu0 %v218
    %v282 = vpop.f32.mrf.mxu0
    %v283 = vadd.f32 0.0, %v282
    %284 = vmatmul.f32.gmra.mxu0 %v221
    %v285 = vpop.f32.mrf.mxu0
    %v286 = vadd.f32 0.0, %v285
    %287 = vmatmul.f32.gmra.mxu0 %v224
    %v288 = vpop.f32.mrf.mxu0
    %v289 = vadd.f32 0.0, %v288
    %290 = vmatmul.f32.gmra.mxu0 %v227
    %v291 = vpop.f32.mrf.mxu0
    %v292 = vadd.f32 0.0, %v291
    %293 = vmatmul.f32.gmra.mxu0 %v230
    %v294 = vpop.f32.mrf.mxu0
    %v295 = vadd.f32 0.0, %v294
    %296 = vmatmul.f32.gmra.mxu0 %v233
    %v297 = vpop.f32.mrf.mxu0
    %v298 = vadd.f32 0.0, %v297
    %299 = vmatmul.f32.gmra.mxu0 %v236
    %v300 = vpop.f32.mrf.mxu0
    %v301 = vadd.f32 0.0, %v300
    %302 = vmatmul.f32.gmra.mxu0 %v239
    %v303 = vpop.f32.mrf.mxu0
    %v304 = vadd.f32 0.0, %v303
    %305 = vmatmul.f32.gmra.mxu0 %v242
    %v306 = vpop.f32.mrf.mxu0
    %v307 = vadd.f32 0.0, %v306
    %308 = vmatmul.f32.gmra.mxu0 %v245
    %v309 = vpop.f32.mrf.mxu0
    %v310 = vadd.f32 0.0, %v309
    %311 = vmatmul.f32.gmra.mxu0 %v248
    %v312 = vpop.f32.mrf.mxu0
    %v313 = vadd.f32 0.0, %v312
    %314 = vmatmul.f32.gmra.mxu0 %v251
    %v315 = vpop.f32.mrf.mxu0
    %v316 = vadd.f32 0.0, %v315
    %317 = vmatmul.f32.gmra.mxu0 %v254
    %v318 = vpop.f32.mrf.mxu0
    %v319 = vadd.f32 0.0, %v318
    %320 = vmatmul.f32.gmra.mxu0 %v257
    %v321 = vpop.f32.mrf.mxu0
    %v322 = vadd.f32 0.0, %v321
    %323 = vmatmul.f32.gmra.mxu0 %v260
    %v324 = vpop.f32.mrf.mxu0
    %v325 = vadd.f32 0.0, %v324
    %326 = vmatmul.f32.gmra.mxu0 %v263
    %v327 = vpop.f32.mrf.mxu0
    %v328 = vadd.f32 0.0, %v327
    %329 = vdwg.mxu0
    %330 = vst [vmem:[#allocation3] sm:$0xff] %v283
    %331 = vst [vmem:[#allocation3 + $0x8] sm:$0xff] %v286
    %332 = vst [vmem:[#allocation3 + $0x10] sm:$0xff] %v289
    %333 = vst [vmem:[#allocation3 + $0x18] sm:$0xff] %v292
    %334 = vst [vmem:[#allocation3 + $0x20] sm:$0xff] %v295
    %335 = vst [vmem:[#allocation3 + $0x28] sm:$0xff] %v298
    %336 = vst [vmem:[#allocation3 + $0x30] sm:$0xff] %v301
    %337 = vst [vmem:[#allocation3 + $0x38] sm:$0xff] %v304
    %338 = vst [vmem:[#allocation3 + $0x40] sm:$0xff] %v307
    %339 = vst [vmem:[#allocation3 + $0x48] sm:$0xff] %v310
    %340 = vst [vmem:[#allocation3 + $0x50] sm:$0xff] %v313
    %341 = vst [vmem:[#allocation3 + $0x58] sm:$0xff] %v316
    %342 = vst [vmem:[#allocation3 + $0x60] sm:$0xff] %v319
    %343 = vst [vmem:[#allocation3 + $0x68] sm:$0xff] %v322
    %344 = vst [vmem:[#allocation3 + $0x70] sm:$0xff] %v325
    %345 = vst [vmem:[#allocation3 + $0x78] sm:$0xff] %v328
    %s346 = scalar_lea.vmem [#allocation2], 16
    %v347 = vld [vmem:[%s346] sm:$0xff]
    %v348 = vld [vmem:[%s346 + $0x8] sm:$0xff]
    %349 = vmatpush.msra.mxu0 0.0
    %350 = vmatpush.msra.mxu0 0.0
    %351 = vmatpush.msra.mxu0 0.0
    %352 = vmatpush.msra.mxu0 0.0
    %353 = vmatpush.msra.mxu0 0.0
    %354 = vmatpush.msra.mxu0 0.0
    %355 = vmatpush.msra.mxu0 0.0
    %356 = vmatpush.msra.mxu0 0.0
    %357 = vmatpush.msra.mxu0 0.0
    %358 = vmatpush.msra.mxu0 0.0
    %359 = vmatpush.msra.mxu0 0.0
    %360 = vmatpush.msra.mxu0 0.0
    %361 = vmatpush.msra.mxu0 0.0
    %362 = vmatpush.msra.mxu0 0.0
    %363 = vmatpush.msra.mxu0 %v348
    %364 = vmatpush.msra.mxu0 %v347
    %365 = vmatmul.f32.gmra.mxu0 %v218
    %v366 = vpop.f32.mrf.mxu0
    %v367 = vadd.f32 0.0, %v366
    %368 = vmatmul.f32.gmra.mxu0 %v221
    %v369 = vpop.f32.mrf.mxu0
    %v370 = vadd.f32 0.0, %v369
    %371 = vmatmul.f32.gmra.mxu0 %v224
    %v372 = vpop.f32.mrf.mxu0
    %v373 = vadd.f32 0.0, %v372
    %374 = vmatmul.f32.gmra.mxu0 %v227
    %v375 = vpop.f32.mrf.mxu0
    %v376 = vadd.f32 0.0, %v375
    %377 = vmatmul.f32.gmra.mxu0 %v230
    %v378 = vpop.f32.mrf.mxu0
    %v379 = vadd.f32 0.0, %v378
    %380 = vmatmul.f32.gmra.mxu0 %v233
    %v381 = vpop.f32.mrf.mxu0
    %v382 = vadd.f32 0.0, %v381
    %383 = vmatmul.f32.gmra.mxu0 %v236
    %v384 = vpop.f32.mrf.mxu0
    %v385 = vadd.f32 0.0, %v384
    %386 = vmatmul.f32.gmra.mxu0 %v239
    %v387 = vpop.f32.mrf.mxu0
    %v388 = vadd.f32 0.0, %v387
    %389 = vmatmul.f32.gmra.mxu0 %v242
    %v390 = vpop.f32.mrf.mxu0
    %v391 = vadd.f32 0.0, %v390
    %392 = vmatmul.f32.gmra.mxu0 %v245
    %v393 = vpop.f32.mrf.mxu0
    %v394 = vadd.f32 0.0, %v393
    %395 = vmatmul.f32.gmra.mxu0 %v248
    %v396 = vpop.f32.mrf.mxu0
    %v397 = vadd.f32 0.0, %v396
    %398 = vmatmul.f32.gmra.mxu0 %v251
    %v399 = vpop.f32.mrf.mxu0
    %v400 = vadd.f32 0.0, %v399
    %401 = vmatmul.f32.gmra.mxu0 %v254
    %v402 = vpop.f32.mrf.mxu0
    %v403 = vadd.f32 0.0, %v402
    %404 = vmatmul.f32.gmra.mxu0 %v257
    %v405 = vpop.f32.mrf.mxu0
    %v406 = vadd.f32 0.0, %v405
    %407 = vmatmul.f32.gmra.mxu0 %v260
    %v408 = vpop.f32.mrf.mxu0
    %v409 = vadd.f32 0.0, %v408
    %410 = vmatmul.f32.gmra.mxu0 %v263
    %v411 = vpop.f32.mrf.mxu0
    %v412 = vadd.f32 0.0, %v411
    %413 = vdwg.mxu0
    %s414 = scalar_lea.vmem [#allocation3], 128
    %415 = vst [vmem:[%s414] sm:$0xff] %v367
    %416 = vst [vmem:[%s414 + $0x8] sm:$0xff] %v370
    %417 = vst [vmem:[%s414 + $0x10] sm:$0xff] %v373
    %418 = vst [vmem:[%s414 + $0x18] sm:$0xff] %v376
    %419 = vst [vmem:[%s414 + $0x20] sm:$0xff] %v379
    %420 = vst [vmem:[%s414 + $0x28] sm:$0xff] %v382
    %421 = vst [vmem:[%s414 + $0x30] sm:$0xff] %v385
    %422 = vst [vmem:[%s414 + $0x38] sm:$0xff] %v388
    %423 = vst [vmem:[%s414 + $0x40] sm:$0xff] %v391
    %424 = vst [vmem:[%s414 + $0x48] sm:$0xff] %v394
    %425 = vst [vmem:[%s414 + $0x50] sm:$0xff] %v397
    %426 = vst [vmem:[%s414 + $0x58] sm:$0xff] %v400
    %427 = vst [vmem:[%s414 + $0x60] sm:$0xff] %v403
    %428 = vst [vmem:[%s414 + $0x68] sm:$0xff] %v406
    %429 = vst [vmem:[%s414 + $0x70] sm:$0xff] %v409
    %430 = vst [vmem:[%s414 + $0x78] sm:$0xff] %v412
    %s431 = scalar_lea.vmem [#allocation2], 32
    %v432 = vld [vmem:[%s431] sm:$0xff]
    %v433 = vld [vmem:[%s431 + $0x8] sm:$0xff]
    %434 = vmatpush.msra.mxu0 0.0
    %435 = vmatpush.msra.mxu0 0.0
    %436 = vmatpush.msra.mxu0 0.0
    %437 = vmatpush.msra.mxu0 0.0
    %438 = vmatpush.msra.mxu0 0.0
    %439 = vmatpush.msra.mxu0 0.0
    %440 = vmatpush.msra.mxu0 0.0
    %441 = vmatpush.msra.mxu0 0.0
    %442 = vmatpush.msra.mxu0 0.0
    %443 = vmatpush.msra.mxu0 0.0
    %444 = vmatpush.msra.mxu0 0.0
    %445 = vmatpush.msra.mxu0 0.0
    %446 = vmatpush.msra.mxu0 0.0
    %447 = vmatpush.msra.mxu0 0.0
    %448 = vmatpush.msra.mxu0 %v433
    %449 = vmatpush.msra.mxu0 %v432
    %450 = vmatmul.f32.gmra.mxu0 %v218
    %v451 = vpop.f32.mrf.mxu0
    %v452 = vadd.f32 0.0, %v451
    %453 = vmatmul.f32.gmra.mxu0 %v221
    %v454 = vpop.f32.mrf.mxu0
    %v455 = vadd.f32 0.0, %v454
    %456 = vmatmul.f32.gmra.mxu0 %v224
    %v457 = vpop.f32.mrf.mxu0
    %v458 = vadd.f32 0.0, %v457
    %459 = vmatmul.f32.gmra.mxu0 %v227
    %v460 = vpop.f32.mrf.mxu0
    %v461 = vadd.f32 0.0, %v460
    %462 = vmatmul.f32.gmra.mxu0 %v230
    %v463 = vpop.f32.mrf.mxu0
    %v464 = vadd.f32 0.0, %v463
    %465 = vmatmul.f32.gmra.mxu0 %v233
    %v466 = vpop.f32.mrf.mxu0
    %v467 = vadd.f32 0.0, %v466
    %468 = vmatmul.f32.gmra.mxu0 %v236
    %v469 = vpop.f32.mrf.mxu0
    %v470 = vadd.f32 0.0, %v469
    %471 = vmatmul.f32.gmra.mxu0 %v239
    %v472 = vpop.f32.mrf.mxu0
    %v473 = vadd.f32 0.0, %v472
    %474 = vmatmul.f32.gmra.mxu0 %v242
    %v475 = vpop.f32.mrf.mxu0
    %v476 = vadd.f32 0.0, %v475
    %477 = vmatmul.f32.gmra.mxu0 %v245
    %v478 = vpop.f32.mrf.mxu0
    %v479 = vadd.f32 0.0, %v478
    %480 = vmatmul.f32.gmra.mxu0 %v248
    %v481 = vpop.f32.mrf.mxu0
    %v482 = vadd.f32 0.0, %v481
    %483 = vmatmul.f32.gmra.mxu0 %v251
    %v484 = vpop.f32.mrf.mxu0
    %v485 = vadd.f32 0.0, %v484
    %486 = vmatmul.f32.gmra.mxu0 %v254
    %v487 = vpop.f32.mrf.mxu0
    %v488 = vadd.f32 0.0, %v487
    %489 = vmatmul.f32.gmra.mxu0 %v257
    %v490 = vpop.f32.mrf.mxu0
    %v491 = vadd.f32 0.0, %v490
    %492 = vmatmul.f32.gmra.mxu0 %v260
    %v493 = vpop.f32.mrf.mxu0
    %v494 = vadd.f32 0.0, %v493
    %495 = vmatmul.f32.gmra.mxu0 %v263
    %v496 = vpop.f32.mrf.mxu0
    %v497 = vadd.f32 0.0, %v496
    %498 = vdwg.mxu0
    %s499 = scalar_lea.vmem [#allocation3], 256
    %500 = vst [vmem:[%s499] sm:$0xff] %v452
    %501 = vst [vmem:[%s499 + $0x8] sm:$0xff] %v455
    %502 = vst [vmem:[%s499 + $0x10] sm:$0xff] %v458
    %503 = vst [vmem:[%s499 + $0x18] sm:$0xff] %v461
    %504 = vst [vmem:[%s499 + $0x20] sm:$0xff] %v464
    %505 = vst [vmem:[%s499 + $0x28] sm:$0xff] %v467
    %506 = vst [vmem:[%s499 + $0x30] sm:$0xff] %v470
    %507 = vst [vmem:[%s499 + $0x38] sm:$0xff] %v473
    %508 = vst [vmem:[%s499 + $0x40] sm:$0xff] %v476
    %509 = vst [vmem:[%s499 + $0x48] sm:$0xff] %v479
    %510 = vst [vmem:[%s499 + $0x50] sm:$0xff] %v482
    %511 = vst [vmem:[%s499 + $0x58] sm:$0xff] %v485
    %512 = vst [vmem:[%s499 + $0x60] sm:$0xff] %v488
    %513 = vst [vmem:[%s499 + $0x68] sm:$0xff] %v491
    %514 = vst [vmem:[%s499 + $0x70] sm:$0xff] %v494
    %515 = vst [vmem:[%s499 + $0x78] sm:$0xff] %v497
    %s516 = scalar_lea.vmem [#allocation2], 48
    %v517 = vld [vmem:[%s516] sm:$0xff]
    %v518 = vld [vmem:[%s516 + $0x8] sm:$0xff]
    %519 = vmatpush.msra.mxu0 0.0
    %520 = vmatpush.msra.mxu0 0.0
    %521 = vmatpush.msra.mxu0 0.0
    %522 = vmatpush.msra.mxu0 0.0
    %523 = vmatpush.msra.mxu0 0.0
    %524 = vmatpush.msra.mxu0 0.0
    %525 = vmatpush.msra.mxu0 0.0
    %526 = vmatpush.msra.mxu0 0.0
    %527 = vmatpush.msra.mxu0 0.0
    %528 = vmatpush.msra.mxu0 0.0
    %529 = vmatpush.msra.mxu0 0.0
    %530 = vmatpush.msra.mxu0 0.0
    %531 = vmatpush.msra.mxu0 0.0
    %532 = vmatpush.msra.mxu0 0.0
    %533 = vmatpush.msra.mxu0 %v518
    %534 = vmatpush.msra.mxu0 %v517
    %535 = vmatmul.f32.gmra.mxu0 %v218
    %v536 = vpop.f32.mrf.mxu0
    %v537 = vadd.f32 0.0, %v536
    %538 = vmatmul.f32.gmra.mxu0 %v221
    %v539 = vpop.f32.mrf.mxu0
    %v540 = vadd.f32 0.0, %v539
    %541 = vmatmul.f32.gmra.mxu0 %v224
    %v542 = vpop.f32.mrf.mxu0
    %v543 = vadd.f32 0.0, %v542
    %544 = vmatmul.f32.gmra.mxu0 %v227
    %v545 = vpop.f32.mrf.mxu0
    %v546 = vadd.f32 0.0, %v545
    %547 = vmatmul.f32.gmra.mxu0 %v230
    %v548 = vpop.f32.mrf.mxu0
    %v549 = vadd.f32 0.0, %v548
    %550 = vmatmul.f32.gmra.mxu0 %v233
    %v551 = vpop.f32.mrf.mxu0
    %v552 = vadd.f32 0.0, %v551
    %553 = vmatmul.f32.gmra.mxu0 %v236
    %v554 = vpop.f32.mrf.mxu0
    %v555 = vadd.f32 0.0, %v554
    %556 = vmatmul.f32.gmra.mxu0 %v239
    %v557 = vpop.f32.mrf.mxu0
    %v558 = vadd.f32 0.0, %v557
    %559 = vmatmul.f32.gmra.mxu0 %v242
    %v560 = vpop.f32.mrf.mxu0
    %v561 = vadd.f32 0.0, %v560
    %562 = vmatmul.f32.gmra.mxu0 %v245
    %v563 = vpop.f32.mrf.mxu0
    %v564 = vadd.f32 0.0, %v563
    %565 = vmatmul.f32.gmra.mxu0 %v248
    %v566 = vpop.f32.mrf.mxu0
    %v567 = vadd.f32 0.0, %v566
    %568 = vmatmul.f32.gmra.mxu0 %v251
    %v569 = vpop.f32.mrf.mxu0
    %v570 = vadd.f32 0.0, %v569
    %571 = vmatmul.f32.gmra.mxu0 %v254
    %v572 = vpop.f32.mrf.mxu0
    %v573 = vadd.f32 0.0, %v572
    %574 = vmatmul.f32.gmra.mxu0 %v257
    %v575 = vpop.f32.mrf.mxu0
    %v576 = vadd.f32 0.0, %v575
    %577 = vmatmul.f32.gmra.mxu0 %v260
    %v578 = vpop.f32.mrf.mxu0
    %v579 = vadd.f32 0.0, %v578
    %580 = vmatmul.f32.gmra.mxu0 %v263
    %v581 = vpop.f32.mrf.mxu0
    %v582 = vadd.f32 0.0, %v581
    %583 = vdwg.mxu0
    %s584 = scalar_lea.vmem [#allocation3], 384
    %585 = vst [vmem:[%s584] sm:$0xff] %v537
    %586 = vst [vmem:[%s584 + $0x8] sm:$0xff] %v540
    %587 = vst [vmem:[%s584 + $0x10] sm:$0xff] %v543
    %588 = vst [vmem:[%s584 + $0x18] sm:$0xff] %v546
    %589 = vst [vmem:[%s584 + $0x20] sm:$0xff] %v549
    %590 = vst [vmem:[%s584 + $0x28] sm:$0xff] %v552
    %591 = vst [vmem:[%s584 + $0x30] sm:$0xff] %v555
    %592 = vst [vmem:[%s584 + $0x38] sm:$0xff] %v558
    %593 = vst [vmem:[%s584 + $0x40] sm:$0xff] %v561
    %594 = vst [vmem:[%s584 + $0x48] sm:$0xff] %v564
    %595 = vst [vmem:[%s584 + $0x50] sm:$0xff] %v567
    %596 = vst [vmem:[%s584 + $0x58] sm:$0xff] %v570
    %597 = vst [vmem:[%s584 + $0x60] sm:$0xff] %v573
    %598 = vst [vmem:[%s584 + $0x68] sm:$0xff] %v576
    %599 = vst [vmem:[%s584 + $0x70] sm:$0xff] %v579
    %600 = vst [vmem:[%s584 + $0x78] sm:$0xff] %v582
    %s601 = scalar_lea.vmem [#allocation2], 64
    %v602 = vld [vmem:[%s601] sm:$0xff]
    %v603 = vld [vmem:[%s601 + $0x8] sm:$0xff]
    %604 = vmatpush.msra.mxu0 0.0
    %605 = vmatpush.msra.mxu0 0.0
    %606 = vmatpush.msra.mxu0 0.0
    %607 = vmatpush.msra.mxu0 0.0
    %608 = vmatpush.msra.mxu0 0.0
    %609 = vmatpush.msra.mxu0 0.0
    %610 = vmatpush.msra.mxu0 0.0
    %611 = vmatpush.msra.mxu0 0.0
    %612 = vmatpush.msra.mxu0 0.0
    %613 = vmatpush.msra.mxu0 0.0
    %614 = vmatpush.msra.mxu0 0.0
    %615 = vmatpush.msra.mxu0 0.0
    %616 = vmatpush.msra.mxu0 0.0
    %617 = vmatpush.msra.mxu0 0.0
    %618 = vmatpush.msra.mxu0 %v603
    %619 = vmatpush.msra.mxu0 %v602
    %620 = vmatmul.f32.gmra.mxu0 %v218
    %v621 = vpop.f32.mrf.mxu0
    %v622 = vadd.f32 0.0, %v621
    %623 = vmatmul.f32.gmra.mxu0 %v221
    %v624 = vpop.f32.mrf.mxu0
    %v625 = vadd.f32 0.0, %v624
    %626 = vmatmul.f32.gmra.mxu0 %v224
    %v627 = vpop.f32.mrf.mxu0
    %v628 = vadd.f32 0.0, %v627
    %629 = vmatmul.f32.gmra.mxu0 %v227
    %v630 = vpop.f32.mrf.mxu0
    %v631 = vadd.f32 0.0, %v630
    %632 = vmatmul.f32.gmra.mxu0 %v230
    %v633 = vpop.f32.mrf.mxu0
    %v634 = vadd.f32 0.0, %v633
    %635 = vmatmul.f32.gmra.mxu0 %v233
    %v636 = vpop.f32.mrf.mxu0
    %v637 = vadd.f32 0.0, %v636
    %638 = vmatmul.f32.gmra.mxu0 %v236
    %v639 = vpop.f32.mrf.mxu0
    %v640 = vadd.f32 0.0, %v639
    %641 = vmatmul.f32.gmra.mxu0 %v239
    %v642 = vpop.f32.mrf.mxu0
    %v643 = vadd.f32 0.0, %v642
    %644 = vmatmul.f32.gmra.mxu0 %v242
    %v645 = vpop.f32.mrf.mxu0
    %v646 = vadd.f32 0.0, %v645
    %647 = vmatmul.f32.gmra.mxu0 %v245
    %v648 = vpop.f32.mrf.mxu0
    %v649 = vadd.f32 0.0, %v648
    %650 = vmatmul.f32.gmra.mxu0 %v248
    %v651 = vpop.f32.mrf.mxu0
    %v652 = vadd.f32 0.0, %v651
    %653 = vmatmul.f32.gmra.mxu0 %v251
    %v654 = vpop.f32.mrf.mxu0
    %v655 = vadd.f32 0.0, %v654
    %656 = vmatmul.f32.gmra.mxu0 %v254
    %v657 = vpop.f32.mrf.mxu0
    %v658 = vadd.f32 0.0, %v657
    %659 = vmatmul.f32.gmra.mxu0 %v257
    %v660 = vpop.f32.mrf.mxu0
    %v661 = vadd.f32 0.0, %v660
    %662 = vmatmul.f32.gmra.mxu0 %v260
    %v663 = vpop.f32.mrf.mxu0
    %v664 = vadd.f32 0.0, %v663
    %665 = vmatmul.f32.gmra.mxu0 %v263
    %v666 = vpop.f32.mrf.mxu0
    %v667 = vadd.f32 0.0, %v666
    %668 = vdwg.mxu0
    %s669 = scalar_lea.vmem [#allocation3], 512
    %670 = vst [vmem:[%s669] sm:$0xff] %v622
    %671 = vst [vmem:[%s669 + $0x8] sm:$0xff] %v625
    %672 = vst [vmem:[%s669 + $0x10] sm:$0xff] %v628
    %673 = vst [vmem:[%s669 + $0x18] sm:$0xff] %v631
    %674 = vst [vmem:[%s669 + $0x20] sm:$0xff] %v634
    %675 = vst [vmem:[%s669 + $0x28] sm:$0xff] %v637
    %676 = vst [vmem:[%s669 + $0x30] sm:$0xff] %v640
    %677 = vst [vmem:[%s669 + $0x38] sm:$0xff] %v643
    %678 = vst [vmem:[%s669 + $0x40] sm:$0xff] %v646
    %679 = vst [vmem:[%s669 + $0x48] sm:$0xff] %v649
    %680 = vst [vmem:[%s669 + $0x50] sm:$0xff] %v652
    %681 = vst [vmem:[%s669 + $0x58] sm:$0xff] %v655
    %682 = vst [vmem:[%s669 + $0x60] sm:$0xff] %v658
    %683 = vst [vmem:[%s669 + $0x68] sm:$0xff] %v661
    %684 = vst [vmem:[%s669 + $0x70] sm:$0xff] %v664
    %685 = vst [vmem:[%s669 + $0x78] sm:$0xff] %v667
    %s686 = scalar_lea.vmem [#allocation2], 80
    %v687 = vld [vmem:[%s686] sm:$0xff]
    %v688 = vld [vmem:[%s686 + $0x8] sm:$0xff]
    %689 = vmatpush.msra.mxu0 0.0
    %690 = vmatpush.msra.mxu0 0.0
    %691 = vmatpush.msra.mxu0 0.0
    %692 = vmatpush.msra.mxu0 0.0
    %693 = vmatpush.msra.mxu0 0.0
    %694 = vmatpush.msra.mxu0 0.0
    %695 = vmatpush.msra.mxu0 0.0
    %696 = vmatpush.msra.mxu0 0.0
    %697 = vmatpush.msra.mxu0 0.0
    %698 = vmatpush.msra.mxu0 0.0
    %699 = vmatpush.msra.mxu0 0.0
    %700 = vmatpush.msra.mxu0 0.0
    %701 = vmatpush.msra.mxu0 0.0
    %702 = vmatpush.msra.mxu0 0.0
    %703 = vmatpush.msra.mxu0 %v688
    %704 = vmatpush.msra.mxu0 %v687
    %705 = vmatmul.f32.gmra.mxu0 %v218
    %v706 = vpop.f32.mrf.mxu0
    %v707 = vadd.f32 0.0, %v706
    %708 = vmatmul.f32.gmra.mxu0 %v221
    %v709 = vpop.f32.mrf.mxu0
    %v710 = vadd.f32 0.0, %v709
    %711 = vmatmul.f32.gmra.mxu0 %v224
    %v712 = vpop.f32.mrf.mxu0
    %v713 = vadd.f32 0.0, %v712
    %714 = vmatmul.f32.gmra.mxu0 %v227
    %v715 = vpop.f32.mrf.mxu0
    %v716 = vadd.f32 0.0, %v715
    %717 = vmatmul.f32.gmra.mxu0 %v230
    %v718 = vpop.f32.mrf.mxu0
    %v719 = vadd.f32 0.0, %v718
    %720 = vmatmul.f32.gmra.mxu0 %v233
    %v721 = vpop.f32.mrf.mxu0
    %v722 = vadd.f32 0.0, %v721
    %723 = vmatmul.f32.gmra.mxu0 %v236
    %v724 = vpop.f32.mrf.mxu0
    %v725 = vadd.f32 0.0, %v724
    %726 = vmatmul.f32.gmra.mxu0 %v239
    %v727 = vpop.f32.mrf.mxu0
    %v728 = vadd.f32 0.0, %v727
    %729 = vmatmul.f32.gmra.mxu0 %v242
    %v730 = vpop.f32.mrf.mxu0
    %v731 = vadd.f32 0.0, %v730
    %732 = vmatmul.f32.gmra.mxu0 %v245
    %v733 = vpop.f32.mrf.mxu0
    %v734 = vadd.f32 0.0, %v733
    %735 = vmatmul.f32.gmra.mxu0 %v248
    %v736 = vpop.f32.mrf.mxu0
    %v737 = vadd.f32 0.0, %v736
    %738 = vmatmul.f32.gmra.mxu0 %v251
    %v739 = vpop.f32.mrf.mxu0
    %v740 = vadd.f32 0.0, %v739
    %741 = vmatmul.f32.gmra.mxu0 %v254
    %v742 = vpop.f32.mrf.mxu0
    %v743 = vadd.f32 0.0, %v742
    %744 = vmatmul.f32.gmra.mxu0 %v257
    %v745 = vpop.f32.mrf.mxu0
    %v746 = vadd.f32 0.0, %v745
    %747 = vmatmul.f32.gmra.mxu0 %v260
    %v748 = vpop.f32.mrf.mxu0
    %v749 = vadd.f32 0.0, %v748
    %750 = vmatmul.f32.gmra.mxu0 %v263
    %v751 = vpop.f32.mrf.mxu0
    %v752 = vadd.f32 0.0, %v751
    %753 = vdwg.mxu0
    %s754 = scalar_lea.vmem [#allocation3], 640
    %755 = vst [vmem:[%s754] sm:$0xff] %v707
    %756 = vst [vmem:[%s754 + $0x8] sm:$0xff] %v710
    %757 = vst [vmem:[%s754 + $0x10] sm:$0xff] %v713
    %758 = vst [vmem:[%s754 + $0x18] sm:$0xff] %v716
    %759 = vst [vmem:[%s754 + $0x20] sm:$0xff] %v719
    %760 = vst [vmem:[%s754 + $0x28] sm:$0xff] %v722
    %761 = vst [vmem:[%s754 + $0x30] sm:$0xff] %v725
    %762 = vst [vmem:[%s754 + $0x38] sm:$0xff] %v728
    %763 = vst [vmem:[%s754 + $0x40] sm:$0xff] %v731
    %764 = vst [vmem:[%s754 + $0x48] sm:$0xff] %v734
    %765 = vst [vmem:[%s754 + $0x50] sm:$0xff] %v737
    %766 = vst [vmem:[%s754 + $0x58] sm:$0xff] %v740
    %767 = vst [vmem:[%s754 + $0x60] sm:$0xff] %v743
    %768 = vst [vmem:[%s754 + $0x68] sm:$0xff] %v746
    %769 = vst [vmem:[%s754 + $0x70] sm:$0xff] %v749
    %770 = vst [vmem:[%s754 + $0x78] sm:$0xff] %v752
    %s771 = scalar_lea.vmem [#allocation2], 96
    %v772 = vld [vmem:[%s771] sm:$0xff]
    %v773 = vld [vmem:[%s771 + $0x8] sm:$0xff]
    %774 = vmatpush.msra.mxu0 0.0
    %775 = vmatpush.msra.mxu0 0.0
    %776 = vmatpush.msra.mxu0 0.0
    %777 = vmatpush.msra.mxu0 0.0
    %778 = vmatpush.msra.mxu0 0.0
    %779 = vmatpush.msra.mxu0 0.0
    %780 = vmatpush.msra.mxu0 0.0
    %781 = vmatpush.msra.mxu0 0.0
    %782 = vmatpush.msra.mxu0 0.0
    %783 = vmatpush.msra.mxu0 0.0
    %784 = vmatpush.msra.mxu0 0.0
    %785 = vmatpush.msra.mxu0 0.0
    %786 = vmatpush.msra.mxu0 0.0
    %787 = vmatpush.msra.mxu0 0.0
    %788 = vmatpush.msra.mxu0 %v773
    %789 = vmatpush.msra.mxu0 %v772
    %790 = vmatmul.f32.gmra.mxu0 %v218
    %v791 = vpop.f32.mrf.mxu0
    %v792 = vadd.f32 0.0, %v791
    %793 = vmatmul.f32.gmra.mxu0 %v221
    %v794 = vpop.f32.mrf.mxu0
    %v795 = vadd.f32 0.0, %v794
    %796 = vmatmul.f32.gmra.mxu0 %v224
    %v797 = vpop.f32.mrf.mxu0
    %v798 = vadd.f32 0.0, %v797
    %799 = vmatmul.f32.gmra.mxu0 %v227
    %v800 = vpop.f32.mrf.mxu0
    %v801 = vadd.f32 0.0, %v800
    %802 = vmatmul.f32.gmra.mxu0 %v230
    %v803 = vpop.f32.mrf.mxu0
    %v804 = vadd.f32 0.0, %v803
    %805 = vmatmul.f32.gmra.mxu0 %v233
    %v806 = vpop.f32.mrf.mxu0
    %v807 = vadd.f32 0.0, %v806
    %808 = vmatmul.f32.gmra.mxu0 %v236
    %v809 = vpop.f32.mrf.mxu0
    %v810 = vadd.f32 0.0, %v809
    %811 = vmatmul.f32.gmra.mxu0 %v239
    %v812 = vpop.f32.mrf.mxu0
    %v813 = vadd.f32 0.0, %v812
    %814 = vmatmul.f32.gmra.mxu0 %v242
    %v815 = vpop.f32.mrf.mxu0
    %v816 = vadd.f32 0.0, %v815
    %817 = vmatmul.f32.gmra.mxu0 %v245
    %v818 = vpop.f32.mrf.mxu0
    %v819 = vadd.f32 0.0, %v818
    %820 = vmatmul.f32.gmra.mxu0 %v248
    %v821 = vpop.f32.mrf.mxu0
    %v822 = vadd.f32 0.0, %v821
    %823 = vmatmul.f32.gmra.mxu0 %v251
    %v824 = vpop.f32.mrf.mxu0
    %v825 = vadd.f32 0.0, %v824
    %826 = vmatmul.f32.gmra.mxu0 %v254
    %v827 = vpop.f32.mrf.mxu0
    %v828 = vadd.f32 0.0, %v827
    %829 = vmatmul.f32.gmra.mxu0 %v257
    %v830 = vpop.f32.mrf.mxu0
    %v831 = vadd.f32 0.0, %v830
    %832 = vmatmul.f32.gmra.mxu0 %v260
    %v833 = vpop.f32.mrf.mxu0
    %v834 = vadd.f32 0.0, %v833
    %835 = vmatmul.f32.gmra.mxu0 %v263
    %v836 = vpop.f32.mrf.mxu0
    %v837 = vadd.f32 0.0, %v836
    %838 = vdwg.mxu0
    %s839 = scalar_lea.vmem [#allocation3], 768
    %840 = vst [vmem:[%s839] sm:$0xff] %v792
    %841 = vst [vmem:[%s839 + $0x8] sm:$0xff] %v795
    %842 = vst [vmem:[%s839 + $0x10] sm:$0xff] %v798
    %843 = vst [vmem:[%s839 + $0x18] sm:$0xff] %v801
    %844 = vst [vmem:[%s839 + $0x20] sm:$0xff] %v804
    %845 = vst [vmem:[%s839 + $0x28] sm:$0xff] %v807
    %846 = vst [vmem:[%s839 + $0x30] sm:$0xff] %v810
    %847 = vst [vmem:[%s839 + $0x38] sm:$0xff] %v813
    %848 = vst [vmem:[%s839 + $0x40] sm:$0xff] %v816
    %849 = vst [vmem:[%s839 + $0x48] sm:$0xff] %v819
    %850 = vst [vmem:[%s839 + $0x50] sm:$0xff] %v822
    %851 = vst [vmem:[%s839 + $0x58] sm:$0xff] %v825
    %852 = vst [vmem:[%s839 + $0x60] sm:$0xff] %v828
    %853 = vst [vmem:[%s839 + $0x68] sm:$0xff] %v831
    %854 = vst [vmem:[%s839 + $0x70] sm:$0xff] %v834
    %855 = vst [vmem:[%s839 + $0x78] sm:$0xff] %v837
    %s856 = scalar_lea.vmem [#allocation2], 112
    %v857 = vld [vmem:[%s856] sm:$0xff]
    %v858 = vld [vmem:[%s856 + $0x8] sm:$0xff]
    %859 = vmatpush.msra.mxu0 0.0
    %860 = vmatpush.msra.mxu0 0.0
    %861 = vmatpush.msra.mxu0 0.0
    %862 = vmatpush.msra.mxu0 0.0
    %863 = vmatpush.msra.mxu0 0.0
    %864 = vmatpush.msra.mxu0 0.0
    %865 = vmatpush.msra.mxu0 0.0
    %866 = vmatpush.msra.mxu0 0.0
    %867 = vmatpush.msra.mxu0 0.0
    %868 = vmatpush.msra.mxu0 0.0
    %869 = vmatpush.msra.mxu0 0.0
    %870 = vmatpush.msra.mxu0 0.0
    %871 = vmatpush.msra.mxu0 0.0
    %872 = vmatpush.msra.mxu0 0.0
    %873 = vmatpush.msra.mxu0 %v858
    %874 = vmatpush.msra.mxu0 %v857
    %875 = vmatmul.f32.gmra.mxu0 %v218
    %v876 = vpop.f32.mrf.mxu0
    %v877 = vadd.f32 0.0, %v876
    %878 = vmatmul.f32.gmra.mxu0 %v221
    %v879 = vpop.f32.mrf.mxu0
    %v880 = vadd.f32 0.0, %v879
    %881 = vmatmul.f32.gmra.mxu0 %v224
    %v882 = vpop.f32.mrf.mxu0
    %v883 = vadd.f32 0.0, %v882
    %884 = vmatmul.f32.gmra.mxu0 %v227
    %v885 = vpop.f32.mrf.mxu0
    %v886 = vadd.f32 0.0, %v885
    %887 = vmatmul.f32.gmra.mxu0 %v230
    %v888 = vpop.f32.mrf.mxu0
    %v889 = vadd.f32 0.0, %v888
    %890 = vmatmul.f32.gmra.mxu0 %v233
    %v891 = vpop.f32.mrf.mxu0
    %v892 = vadd.f32 0.0, %v891
    %893 = vmatmul.f32.gmra.mxu0 %v236
    %v894 = vpop.f32.mrf.mxu0
    %v895 = vadd.f32 0.0, %v894
    %896 = vmatmul.f32.gmra.mxu0 %v239
    %v897 = vpop.f32.mrf.mxu0
    %v898 = vadd.f32 0.0, %v897
    %899 = vmatmul.f32.gmra.mxu0 %v242
    %v900 = vpop.f32.mrf.mxu0
    %v901 = vadd.f32 0.0, %v900
    %902 = vmatmul.f32.gmra.mxu0 %v245
    %v903 = vpop.f32.mrf.mxu0
    %v904 = vadd.f32 0.0, %v903
    %905 = vmatmul.f32.gmra.mxu0 %v248
    %v906 = vpop.f32.mrf.mxu0
    %v907 = vadd.f32 0.0, %v906
    %908 = vmatmul.f32.gmra.mxu0 %v251
    %v909 = vpop.f32.mrf.mxu0
    %v910 = vadd.f32 0.0, %v909
    %911 = vmatmul.f32.gmra.mxu0 %v254
    %v912 = vpop.f32.mrf.mxu0
    %v913 = vadd.f32 0.0, %v912
    %914 = vmatmul.f32.gmra.mxu0 %v257
    %v915 = vpop.f32.mrf.mxu0
    %v916 = vadd.f32 0.0, %v915
    %917 = vmatmul.f32.gmra.mxu0 %v260
    %v918 = vpop.f32.mrf.mxu0
    %v919 = vadd.f32 0.0, %v918
    %920 = vmatmul.f32.gmra.mxu0 %v263
    %v921 = vpop.f32.mrf.mxu0
    %v922 = vadd.f32 0.0, %v921
    %923 = vdwg.mxu0
    %s924 = scalar_lea.vmem [#allocation3], 896
    %925 = vst [vmem:[%s924] sm:$0xff] %v877
    %926 = vst [vmem:[%s924 + $0x8] sm:$0xff] %v880
    %927 = vst [vmem:[%s924 + $0x10] sm:$0xff] %v883
    %928 = vst [vmem:[%s924 + $0x18] sm:$0xff] %v886
    %929 = vst [vmem:[%s924 + $0x20] sm:$0xff] %v889
    %930 = vst [vmem:[%s924 + $0x28] sm:$0xff] %v892
    %931 = vst [vmem:[%s924 + $0x30] sm:$0xff] %v895
    %932 = vst [vmem:[%s924 + $0x38] sm:$0xff] %v898
    %933 = vst [vmem:[%s924 + $0x40] sm:$0xff] %v901
    %934 = vst [vmem:[%s924 + $0x48] sm:$0xff] %v904
    %935 = vst [vmem:[%s924 + $0x50] sm:$0xff] %v907
    %936 = vst [vmem:[%s924 + $0x58] sm:$0xff] %v910
    %937 = vst [vmem:[%s924 + $0x60] sm:$0xff] %v913
    %938 = vst [vmem:[%s924 + $0x68] sm:$0xff] %v916
    %939 = vst [vmem:[%s924 + $0x70] sm:$0xff] %v919
    %940 = vst [vmem:[%s924 + $0x78] sm:$0xff] %v922
    // Predicated region
    $region14: #{tpu_custom_call.1} parent=1 // pred_check
      _
    $region15: #{tpu_custom_call.1} parent=1 // pred_check_branch
      %942 = sbr.rel (0) target = $region17
    $region16: #{tpu_custom_call.1} parent=1 // pred_region
      %944 = vsyncadd [#allocation4], 0
      %s945 = sshll.u32 [#allocation3], 4
      %s946 = int_to_ptr.vmem [resolvable:$true] %s945
      %s947 = sshll.u32 %s3, 4
      %s948 = int_to_ptr.hbm [resolvable:$true] %s947
      %953 = dma.vmem_to_hbm [thread:$0]  %s946, 16384, %s948, [#allocation4], 128, 128, 8
    $region17: #{tpu_custom_call.1} parent=1 // pred_fallthru
      _
    // Predicated region
    $region18: #{tpu_custom_call.1} parent=1 // pred_check
      _
    $region19: #{tpu_custom_call.1} parent=1 // pred_check_branch
      %955 = sbr.rel (0) target = $region21
    $region20: #{tpu_custom_call.1} parent=1 // pred_region
      %957 = dma.done [#allocation4], 16384
    $region21: #{tpu_custom_call.1} parent=1 // pred_fallthru
      _
    %958 = vsyncpa [#allocation4], 1

</llo_original>
